<compile_context>
chip_gen: v7x
topology: tpu7x:2x2x1
jax: 0.10.0
libtpu: 0.0.40
codegen_flags: <defaults>
</compile_context>

<pallas_src>
import math

import jax
import jax.numpy as jnp
from jax.experimental import pallas as pl
from jax.experimental.pallas import tpu as pltpu

H1, H2 = 128, 64          # hidden widths of each (actor/critic) branch
LOG_2PI = math.log(2.0 * math.pi)


def _ceil_to(n, m):
    return ((n + m - 1) // m) * m


def _dims(state_dim, action_dim):
    """Static layout constants for the packed parameter buffers."""
    Sp = _ceil_to(max(state_dim, 1), 8)          # padded state width (8-aligned)
    W = max(8, _ceil_to(action_dim + 2, 8))      # narrow action/output slab width
    r_b1 = Sp                                    # [1, 256] layer-1 biases
    r_w2 = r_b1 + 8                              # [256, 128] block-diag layer-2 W
    r_b2 = r_w2 + 2 * H1                         # [1, 128] layer-2 biases
    wp_rows = r_b2 + 8
    return Sp, W, r_b1, r_w2, r_b2, wp_rows


# ----------------------------------------------------------------------------
# Kernel: 3 fused matmuls (bf16 weights, f32 accumulation) + diag-MVN log_prob,
# single narrow (W-lane) output slab: cols 0:A mean, col A value, col A+1 logp.
# ----------------------------------------------------------------------------
def _make_kernel(Sp, r_b1, r_w2, r_b2, act_fn):
    def kernel(state_ref, action_ref, wp_ref, w3_ref, cp_ref, out_ref):
        wdt = wp_ref.dtype

        # fused layer 1: [Sp, 256] = concat(actor_w1, critic_w1) (zero-padded rows)
        x = state_ref[...].astype(wdt)                               # [TB, Sp]
        h1 = act_fn(jnp.dot(x, wp_ref[0:Sp, :],
                            preferred_element_type=jnp.float32)
                    + wp_ref[r_b1:r_b1 + 1, :])                      # [TB, 256] f32

        # fused layer 2: block-diag [256, 128]
        h2 = act_fn(jnp.dot(h1.astype(wdt),
                            wp_ref[r_w2:r_w2 + 2 * H1, 0:2 * H2],
                            preferred_element_type=jnp.float32)
                    + wp_ref[r_b2:r_b2 + 1, 0:2 * H2])               # [TB, 128] f32

        # fused layer 3: block-diag [128, W]; cols 0:A actor pre-act, col A value
        z3 = (jnp.dot(h2.astype(wdt), w3_ref[0:2 * H2, :],
                      preferred_element_type=jnp.float32)
              + w3_ref[2 * H2:2 * H2 + 1, :])                        # [TB, W] f32
        t = act_fn(z3)                                               # actor activation

        # f32 constants: row0 = -0.5/var (zero outside 0:A), row1 = logp const,
        # row2 = mean-column mask, row3 = logprob-column mask.
        nhiv = cp_ref[0:1, :]
        c_row = cp_ref[1:2, :]
        mask_mean = cp_ref[2:3, :]
        mask_lp = cp_ref[3:4, :]

        # diag-MVN log_prob; nhiv is zero outside cols 0:A so extra lanes
        # (incl. the value column) contribute nothing to the reduction.
        diff = action_ref[...] - t                                   # [TB, W] f32
        logprob = jnp.sum(diff * diff * nhiv, axis=-1, keepdims=True) + c_row

        slab = jnp.where(mask_mean > 0.0, t, z3)                     # mean | value
        slab = jnp.where(mask_lp > 0.0, logprob, slab)               # | logprob
        out_ref[...] = slab

    return kernel


# ----------------------------------------------------------------------------
# Host-side parameter packing (built once per PPO update; amortized).
# ----------------------------------------------------------------------------
def pack_params(params, action_var, state_dim, action_dim,
                param_dtype=jnp.bfloat16):
    S, A = state_dim, action_dim
    Sp, W, r_b1, r_w2, r_b2, wp_rows = _dims(S, A)

    # --- main weight buffer: w1, b1, w2, b2 -------------------------------
    wp = jnp.zeros((wp_rows, 2 * H1), jnp.float32)
    wp = wp.at[0:S, 0:H1].set(params["aw1"]).at[0:S, H1:].set(params["cw1"])
    wp = wp.at[r_b1, 0:H1].set(params["ab1"][0]).at[r_b1, H1:].set(params["cb1"][0])
    wp = wp.at[r_w2:r_w2 + H1, 0:H2].set(params["aw2"])
    wp = wp.at[r_w2 + H1:r_w2 + 2 * H1, H2:2 * H2].set(params["cw2"])
    wp = wp.at[r_b2, 0:H2].set(params["ab2"][0]).at[r_b2, H2:2 * H2].set(params["cb2"][0])
    wp = wp.astype(param_dtype)

    # --- layer-3 tail buffer: w3 [128, W] + b3 row ------------------------
    w3p = jnp.zeros((2 * H2 + 8, W), jnp.float32)
    w3p = w3p.at[0:H2, 0:A].set(params["aw3"])
    w3p = w3p.at[H2:2 * H2, A:A + 1].set(params["cw3"])
    w3p = w3p.at[2 * H2, 0:A].set(params["ab3"][0])
    w3p = w3p.at[2 * H2, A].set(params["cb3"][0, 0])
    w3p = w3p.astype(param_dtype)

    # --- f32 constants buffer ---------------------------------------------
    var = jnp.reshape(action_var, (-1,))[:A].astype(jnp.float32)
    logp_const = -0.5 * (A * LOG_2PI + jnp.sum(jnp.log(var)))
    cp = jnp.zeros((8, W), jnp.float32)
    cp = cp.at[0, 0:A].set(-0.5 / var)           # -0.5 * inv_var (zero elsewhere)
    cp = cp.at[1, :].set(logp_const)             # broadcast log-prob constant
    cp = cp.at[2, 0:A].set(1.0)                  # mean-column mask
    cp = cp.at[3, A + 1].set(1.0)                # logprob-column mask
    return wp, w3p, cp


# ----------------------------------------------------------------------------
# Wrapper: batch-tiled grid, narrow lane-dense output slab, entropy on host.
# ----------------------------------------------------------------------------
def actor_critic_evaluate(state, action, params, action_var, *,
                          activation="tanh", block_b=2048,
                          param_dtype=jnp.bfloat16):
    """Returns (action_logprobs [B], state_value [B], dist_entropy [B],
                action_mean [B, A])."""
    state = state.astype(jnp.float32)
    action = action.astype(jnp.float32)
    B, S = state.shape
    A = action.shape[-1]
    act_fn = jnp.tanh if activation == "tanh" else jax.nn.relu

    Sp, W, r_b1, r_w2, r_b2, wp_rows = _dims(S, A)
    wp, w3p, cp = pack_params(params, action_var, S, A, param_dtype)

    # Batch tiling: 8-aligned tile, capped at ceil(B/2) so the grid has >= 2
    # steps whenever possible (lets v7x's two TensorCores split the batch).
    half_b = _ceil_to(max(-(-B // 2), 1), 8)
    TB = max(8, min(block_b, half_b))
    Bp = _ceil_to(B, TB)

    state_p = jnp.zeros((Bp, Sp), jnp.float32).at[:B, :S].set(state)
    action_p = jnp.zeros((Bp, W), jnp.float32).at[:B, :A].set(action)

    kernel = _make_kernel(Sp, r_b1, r_w2, r_b2, act_fn)

    # TODO(synk): if block_b is pushed above ~4096, set vmem_limit_bytes
    #             explicitly (stay well under v7x's 64 MiB physical VMEM).
    slab = pl.pallas_call(
        kernel,
        out_shape=jax.ShapeDtypeStruct((Bp, W), jnp.float32),
        grid_spec=pltpu.PrefetchScalarGridSpec(
            num_scalar_prefetch=0,
            grid=(Bp // TB,),
            in_specs=[
                pl.BlockSpec((TB, Sp), lambda i: (i, 0)),            # state stream
                pl.BlockSpec((TB, W), lambda i: (i, 0)),             # narrow actions
                pl.BlockSpec((wp_rows, 2 * H1), lambda i: (0, 0)),   # weights (resident)
                pl.BlockSpec((2 * H2 + 8, W), lambda i: (0, 0)),     # layer-3 tail
                pl.BlockSpec((8, W), lambda i: (0, 0)),              # f32 constants
            ],
            out_specs=pl.BlockSpec((TB, W), lambda i: (i, 0)),
        ),
        compiler_params=pltpu.CompilerParams(
            dimension_semantics=("parallel",)),
    )(state_p, action_p, wp, w3p, cp)

    mean = slab[:B, :A]
    value = slab[:B, A]
    logprob = slab[:B, A + 1]

    # Entropy of a diag-MVN is batch-constant: compute on the host side.
    var = jnp.reshape(action_var, (-1,))[:A].astype(jnp.float32)
    log_det = jnp.sum(jnp.log(var))
    entropy = jnp.broadcast_to(0.5 * A * (1.0 + LOG_2PI) + 0.5 * log_det, (B,))
    return logprob, value, entropy, mean


# ----------------------------------------------------------------------------
# Parameter init (PyTorch Linear default: U(-1/sqrt(fan_in), 1/sqrt(fan_in))),
# stored transposed vs. torch (W is [in, out]) so the kernel computes x @ W + b.
# ----------------------------------------------------------------------------
def init_params(key, state_dim, action_dim):
    def linear(key, fan_in, fan_out):
        kw, kb = jax.random.split(key)
        bound = 1.0 / math.sqrt(fan_in)
        w = jax.random.uniform(kw, (fan_in, fan_out), jnp.float32, -bound, bound)
        b = jax.random.uniform(kb, (1, fan_out), jnp.float32, -bound, bound)
        return w, b

    keys = jax.random.split(key, 6)
    p = {}
    p["aw1"], p["ab1"] = linear(keys[0], state_dim, H1)
    p["aw2"], p["ab2"] = linear(keys[1], H1, H2)
    p["aw3"], p["ab3"] = linear(keys[2], H2, action_dim)
    p["cw1"], p["cb1"] = linear(keys[3], state_dim, H1)
    p["cw2"], p["cb2"] = linear(keys[4], H1, H2)
    p["cw3"], p["cb3"] = linear(keys[5], H2, 1)
    return p


# ----------------------------------------------------------------------------
# Pure-JAX reference (unfused, f32) for correctness
# ----------------------------------------------------------------------------
def reference_evaluate(state, action, p, action_var):
    h = jnp.tanh(state @ p["aw1"] + p["ab1"])
    h = jnp.tanh(h @ p["aw2"] + p["ab2"])
    mean = jnp.tanh(h @ p["aw3"] + p["ab3"])

    hc = jnp.tanh(state @ p["cw1"] + p["cb1"])
    hc = jnp.tanh(hc @ p["cw2"] + p["cb2"])
    value = (hc @ p["cw3"] + p["cb3"])[:, 0]

    var = jnp.reshape(action_var, (-1,))
    A = action.shape[-1]
    log_det = jnp.sum(jnp.log(var))
    diff = action - mean
    mahal = jnp.sum(diff * diff / var, axis=-1)
    logprob = -0.5 * (mahal + A * LOG_2PI + log_det)
    entropy = jnp.full((state.shape[0],), 0.5 * A * (1 + LOG_2PI) + 0.5 * log_det)
    return logprob, value, entropy, mean


if __name__ == "__main__":
    STATE_DIM = 16
    ACTION_DIM = 4
    ACTION_STD = 0.5

    key = jax.random.PRNGKey(0)
    k_param, k_state, k_action = jax.random.split(key, 3)

    params = init_params(k_param, STATE_DIM, ACTION_DIM)
    action_var = jnp.full((1, ACTION_DIM), ACTION_STD ** 2, dtype=jnp.float32)

    def check(batch, block_b, param_dtype, tol, tol_lp):
        ks, ka = jax.random.split(jax.random.fold_in(k_state, batch))
        state = jax.random.normal(ks, (batch, STATE_DIM), dtype=jnp.float32)
        action = jax.random.normal(ka, (batch, ACTION_DIM), dtype=jnp.float32)

        lp, v, e, m = actor_critic_evaluate(state, action, params, action_var,
                                            block_b=block_b,
                                            param_dtype=param_dtype)
        jax.block_until_ready((lp, v, e, m))
        rlp, rv, re, rm = reference_evaluate(state, action, params, action_var)
        assert jnp.allclose(m, rm, atol=tol, rtol=tol), "action_mean mismatch"
        assert jnp.allclose(v, rv, atol=tol, rtol=tol), "value mismatch"
        assert jnp.allclose(lp, rlp, atol=tol_lp, rtol=0.05), "logprob mismatch"
        assert jnp.allclose(e, re, atol=1e-4, rtol=1e-4), "entropy mismatch"

    # f32 parameter path: tight tolerance (validates kernel structure exactly).
    check(batch=8, block_b=2048, param_dtype=jnp.float32, tol=1e-4, tol_lp=1e-3)
    check(batch=200, block_b=64, param_dtype=jnp.float32, tol=1e-4, tol_lp=1e-3)
    check(batch=300, block_b=2048, param_dtype=jnp.float32, tol=1e-4, tol_lp=1e-3)

    # bf16 parameter path (default / fast): loose tolerance for bf16 matmuls.
    check(batch=8, block_b=2048, param_dtype=jnp.bfloat16, tol=5e-2, tol_lp=1.0)
    check(batch=200, block_b=64, param_dtype=jnp.bfloat16, tol=5e-2, tol_lp=1.0)

    print("KERNEL_OK")
</pallas_src>

<mosaic_0001>
module attributes {stable_mosaic.version = 11 : i64} {
  func.func @kernel(%arg0: i32, %arg1: memref<8x16xf32, #tpu.memory_space<vmem>>, %arg2: memref<8x8xf32, #tpu.memory_space<vmem>>, %arg3: memref<288x256xf32, #tpu.memory_space<vmem>>, %arg4: memref<136x8xf32, #tpu.memory_space<vmem>>, %arg5: memref<8x8xf32, #tpu.memory_space<vmem>>, %arg6: memref<8x8xf32, #tpu.memory_space<vmem>>) attributes {dimension_semantics = [#tpu.dimension_semantics<parallel>], iteration_bounds = array<i64: 1>, scalar_prefetch = 0 : i64, scratch_operands = 0 : i64, tpu.core_type = #tpu.core_type<tc>, window_params = [{transform_indices = @transform_0, window_bounds = array<i64: 8, 16>}, {transform_indices = @transform_1, window_bounds = array<i64: 8, 8>}, {pipeline_mode = #tpu.pipeline_mode<synchronous>, transform_indices = @transform_2, window_bounds = array<i64: 288, 256>}, {pipeline_mode = #tpu.pipeline_mode<synchronous>, transform_indices = @transform_3, window_bounds = array<i64: 136, 8>}, {pipeline_mode = #tpu.pipeline_mode<synchronous>, transform_indices = @transform_4, window_bounds = array<i64: 8, 8>}, {transform_indices = @transform_5, window_bounds = array<i64: 8, 8>}]} {
    %c0 = arith.constant 0 : index
    %c0_0 = arith.constant 0 : index
    %0 = vector.load %arg1[%c0, %c0_0] : memref<8x16xf32, #tpu.memory_space<vmem>>, vector<8x16xf32>
    %c0_1 = arith.constant 0 : index
    %c0_2 = arith.constant 0 : index
    %1 = vector.load %arg3[%c0_1, %c0_2] : memref<288x256xf32, #tpu.memory_space<vmem>>, vector<16x256xf32>
    %cst = arith.constant dense<0.000000e+00> : vector<8x256xf32>
    %2 = tpu.matmul %0, %1, %cst {dimension_numbers = #tpu.dot_dimension_numbers<[1], [0], [0], [1], [0, 0, 1, 1], [], []>} : vector<8x16xf32>, vector<16x256xf32>, vector<8x256xf32> -> vector<8x256xf32>
    %c16 = arith.constant 16 : index
    %c0_3 = arith.constant 0 : index
    %3 = vector.load %arg3[%c16, %c0_3] : memref<288x256xf32, #tpu.memory_space<vmem>>, vector<1x256xf32>
    %4 = vector.broadcast %3 : vector<1x256xf32> to vector<8x256xf32>
    %5 = arith.addf %2, %4 : vector<8x256xf32>
    %6 = math.tanh %5 : vector<8x256xf32>
    %c24 = arith.constant 24 : index
    %c0_4 = arith.constant 0 : index
    %7 = vector.load %arg3[%c24, %c0_4] : memref<288x256xf32, #tpu.memory_space<vmem>>, vector<256x128xf32>
    %cst_5 = arith.constant dense<0.000000e+00> : vector<8x128xf32>
    %8 = tpu.matmul %6, %7, %cst_5 {dimension_numbers = #tpu.dot_dimension_numbers<[1], [0], [0], [1], [0, 0, 1, 1], [], []>} : vector<8x256xf32>, vector<256x128xf32>, vector<8x128xf32> -> vector<8x128xf32>
    %c280 = arith.constant 280 : index
    %c0_6 = arith.constant 0 : index
    %9 = vector.load %arg3[%c280, %c0_6] : memref<288x256xf32, #tpu.memory_space<vmem>>, vector<1x128xf32>
    %10 = vector.broadcast %9 : vector<1x128xf32> to vector<8x128xf32>
    %11 = arith.addf %8, %10 : vector<8x128xf32>
    %12 = math.tanh %11 : vector<8x128xf32>
    %c0_7 = arith.constant 0 : index
    %c0_8 = arith.constant 0 : index
    %13 = vector.load %arg4[%c0_7, %c0_8] : memref<136x8xf32, #tpu.memory_space<vmem>>, vector<128x8xf32>
    %cst_9 = arith.constant dense<0.000000e+00> : vector<8x8xf32>
    %14 = tpu.matmul %12, %13, %cst_9 {dimension_numbers = #tpu.dot_dimension_numbers<[1], [0], [0], [1], [0, 0, 1, 1], [], []>} : vector<8x128xf32>, vector<128x8xf32>, vector<8x8xf32> -> vector<8x8xf32>
    %c128 = arith.constant 128 : index
    %c0_10 = arith.constant 0 : index
    %15 = vector.load %arg4[%c128, %c0_10] : memref<136x8xf32, #tpu.memory_space<vmem>>, vector<1x8xf32>
    %16 = vector.broadcast %15 : vector<1x8xf32> to vector<8x8xf32>
    %17 = arith.addf %14, %16 : vector<8x8xf32>
    %18 = math.tanh %17 : vector<8x8xf32>
    %c0_11 = arith.constant 0 : index
    %c0_12 = arith.constant 0 : index
    %19 = vector.load %arg5[%c0_11, %c0_12] : memref<8x8xf32, #tpu.memory_space<vmem>>, vector<1x8xf32>
    %c1 = arith.constant 1 : index
    %c0_13 = arith.constant 0 : index
    %20 = vector.load %arg5[%c1, %c0_13] : memref<8x8xf32, #tpu.memory_space<vmem>>, vector<1x8xf32>
    %c2 = arith.constant 2 : index
    %c0_14 = arith.constant 0 : index
    %21 = vector.load %arg5[%c2, %c0_14] : memref<8x8xf32, #tpu.memory_space<vmem>>, vector<1x8xf32>
    %c3 = arith.constant 3 : index
    %c0_15 = arith.constant 0 : index
    %22 = vector.load %arg5[%c3, %c0_15] : memref<8x8xf32, #tpu.memory_space<vmem>>, vector<1x8xf32>
    %c0_16 = arith.constant 0 : index
    %c0_17 = arith.constant 0 : index
    %23 = vector.load %arg2[%c0_16, %c0_17] : memref<8x8xf32, #tpu.memory_space<vmem>>, vector<8x8xf32>
    %24 = arith.subf %23, %18 : vector<8x8xf32>
    %25 = arith.mulf %24, %24 : vector<8x8xf32>
    %26 = vector.broadcast %19 : vector<1x8xf32> to vector<8x8xf32>
    %27 = arith.mulf %25, %26 : vector<8x8xf32>
    %cst_18 = arith.constant dense<0.000000e+00> : vector<8xf32>
    %28 = vector.multi_reduction <add>, %27, %cst_18 [1] : vector<8x8xf32> to vector<8xf32>
    %29 = vector.shape_cast %28 : vector<8xf32> to vector<8x1xf32>
    %30 = vector.broadcast %29 : vector<8x1xf32> to vector<8x8xf32>
    %31 = vector.broadcast %20 : vector<1x8xf32> to vector<8x8xf32>
    %32 = arith.addf %30, %31 : vector<8x8xf32>
    %cst_19 = arith.constant 0.000000e+00 : f32
    %33 = vector.broadcast %cst_19 : f32 to vector<1x8xf32>
    %34 = arith.cmpf ogt, %21, %33 : vector<1x8xf32>
    %35 = vector.shape_cast %34 : vector<1x8xi1> to vector<1x8xi1>
    %36 = vector.broadcast %35 : vector<1x8xi1> to vector<8x8xi1>
    %37 = arith.select %36, %18, %17 : vector<8x8xi1>, vector<8x8xf32>
    %cst_20 = arith.constant 0.000000e+00 : f32
    %38 = vector.broadcast %cst_20 : f32 to vector<1x8xf32>
    %39 = arith.cmpf ogt, %22, %38 : vector<1x8xf32>
    %40 = vector.shape_cast %39 : vector<1x8xi1> to vector<1x8xi1>
    %41 = vector.broadcast %40 : vector<1x8xi1> to vector<8x8xi1>
    %42 = arith.select %41, %32, %37 : vector<8x8xi1>, vector<8x8xf32>
    %c0_21 = arith.constant 0 : index
    %c0_22 = arith.constant 0 : index
    %43 = vector.load %arg6[%c0_21, %c0_22] : memref<8x8xf32, #tpu.memory_space<vmem>>, vector<8x8xf32>
    tpu.vector_store %arg6[%c0_21, %c0_22], %42 {strides = array<i32>} : memref<8x8xf32, #tpu.memory_space<vmem>>, vector<8x8xf32>,
    return
  }
  func.func @transform_0(%arg0: i32) -> (i32, i32) {
    %c0_i32 = arith.constant 0 : i32
    %c0_i32_0 = arith.constant 0 : i32
    return %arg0, %c0_i32 : i32, i32
  }
  func.func @transform_1(%arg0: i32) -> (i32, i32) {
    %c0_i32 = arith.constant 0 : i32
    %c0_i32_0 = arith.constant 0 : i32
    return %arg0, %c0_i32 : i32, i32
  }
  func.func @transform_2(%arg0: i32) -> (i32, i32) {
    %c0_i32 = arith.constant 0 : i32
    %c0_i32_0 = arith.constant 0 : i32
    %c0_i32_1 = arith.constant 0 : i32
    return %c0_i32, %c0_i32_0 : i32, i32
  }
  func.func @transform_3(%arg0: i32) -> (i32, i32) {
    %c0_i32 = arith.constant 0 : i32
    %c0_i32_0 = arith.constant 0 : i32
    %c0_i32_1 = arith.constant 0 : i32
    return %c0_i32, %c0_i32_0 : i32, i32
  }
  func.func @transform_4(%arg0: i32) -> (i32, i32) {
    %c0_i32 = arith.constant 0 : i32
    %c0_i32_0 = arith.constant 0 : i32
    %c0_i32_1 = arith.constant 0 : i32
    return %c0_i32, %c0_i32_0 : i32, i32
  }
  func.func @transform_5(%arg0: i32) -> (i32, i32) {
    %c0_i32 = arith.constant 0 : i32
    %c0_i32_0 = arith.constant 0 : i32
    return %arg0, %c0_i32 : i32, i32
  }
}

</mosaic_0001>

<llo_original>
// kernel: tpu_custom_call.1
$region0: #{tpu_custom_call.1}
  #allocation0 [shape = 'u32[]', space=smem, size = 0x4, offset = 0x4, fixed_abs, tag = 'smem constant byte address 0x4 - core index']
  #allocation1 [shape = 'u32[144,128]{1,0:T(1,128)}', space=vmem, size = 0x12000, scoped, tag = 'internal scratch']
  %s0 = inlined_call_operand.vmem [shape: f32[8,16], index: 0, kind: input, shape index: {}]
  %s1 = inlined_call_operand.vmem [shape: f32[8,8], index: 1, kind: input, shape index: {}]
  %s2 = inlined_call_operand.hbm [shape: f32[288,256], index: 2, kind: input, shape index: {}]
  %s3 = inlined_call_operand.vmem [shape: f32[136,8], index: 3, kind: input, shape index: {}]
  %s4 = inlined_call_operand.vmem [shape: f32[8,8], index: 4, kind: input, shape index: {}]
  %s5 = inlined_call_operand.hbm [shape: f32[8,8], index: 5, kind: output, shape index: {}]
  %s6 = sld [smem:[#allocation0]]
  $region34: #{tpu_custom_call.1} parent=0
    _
  %s8 = ssub.s32 1, %s6
  %s9 = scalar_select 0, %s8, %s6
  $region1: #{tpu_custom_call.1} parent=0
    #allocation2 [shape = 'u8[294912]{0}', space=vmem, size = 0x48000, scoped, tag = 'input window, operand 2, single buffered']
    #allocation3 [shape = 's32[1]{0}', space=sflag, size = 0x4, scoped, tag = 'scoped memory for tpu_custom_call.1']
    #allocation4 [shape = 's32[1]{0}', space=sflag, size = 0x4, scoped, tag = 'scoped memory for tpu_custom_call.1']
    #allocation5 [shape = 'u8[4096]{0}', space=vmem, size = 0x1000, scoped, tag = 'output window, operand 0, single buffered']
    %10 = vsyncpa [#allocation3], 0
    %11 = vsyncpa [#allocation4], 0
    // Predicated region
    $region2: #{tpu_custom_call.1} parent=1 // pred_check
      _
    $region3: #{tpu_custom_call.1} parent=1 // pred_check_branch
      %13 = sbr.rel (0) target = $region5
    $region4: #{tpu_custom_call.1} parent=1 // pred_region
      _
    $region5: #{tpu_custom_call.1} parent=1 // pred_fallthru
      _
    // Predicated region
    $region6: #{tpu_custom_call.1} parent=1 // pred_check
      _
    $region7: #{tpu_custom_call.1} parent=1 // pred_check_branch
      %15 = sbr.rel (0) target = $region9
    $region8: #{tpu_custom_call.1} parent=1 // pred_region
      _
    $region9: #{tpu_custom_call.1} parent=1 // pred_fallthru
      _
    // Predicated region
    $region10: #{tpu_custom_call.1} parent=1 // pred_check
      _
    $region11: #{tpu_custom_call.1} parent=1 // pred_check_branch
      %17 = sbr.rel (0) target = $region13
    $region12: #{tpu_custom_call.1} parent=1 // pred_region
      %s19 = ssub.s32 9216, 9216
      %20 = vsyncadd [#allocation3], %s19
      %s21 = sshll.u32 [#allocation2], 4
      %s22 = int_to_ptr.vmem [resolvable:$true] %s21
      %27 = dma.hbm_to_vmem [thread:$0]  %s2, 9216, %s22, [#allocation3], 256, 256, 16
    $region13: #{tpu_custom_call.1} parent=1 // pred_fallthru
      _
    // Predicated region
    $region14: #{tpu_custom_call.1} parent=1 // pred_check
      _
    $region15: #{tpu_custom_call.1} parent=1 // pred_check_branch
      %29 = sbr.rel (0) target = $region17
    $region16: #{tpu_custom_call.1} parent=1 // pred_region
      _
    $region17: #{tpu_custom_call.1} parent=1 // pred_fallthru
      _
    // Predicated region
    $region18: #{tpu_custom_call.1} parent=1 // pred_check
      _
    $region19: #{tpu_custom_call.1} parent=1 // pred_check_branch
      %31 = sbr.rel (0) target = $region21
    $region20: #{tpu_custom_call.1} parent=1 // pred_region
      _
    $region21: #{tpu_custom_call.1} parent=1 // pred_fallthru
      _
    // Predicated region
    $region22: #{tpu_custom_call.1} parent=1 // pred_check
      _
    $region23: #{tpu_custom_call.1} parent=1 // pred_check_branch
      %33 = sbr.rel (0) target = $region25
    $region24: #{tpu_custom_call.1} parent=1 // pred_region
      %34 = dma.done [#allocation3], 9216
    $region25: #{tpu_custom_call.1} parent=1 // pred_fallthru
      _
    %v35 = vld [vmem:[%s0] sm:$0xff]
    %v36 = vld [vmem:[#allocation2] sm:$0xff]
    %v37 = vld [vmem:[#allocation2 + $0x8] sm:$0xff]
    %v38 = vld [vmem:[#allocation2 + $0x10] sm:$0xff]
    %v39 = vld [vmem:[#allocation2 + $0x18] sm:$0xff]
    %s40 = scalar_lea.vmem [#allocation2], 32
    %v41 = vld [vmem:[%s40] ss:$8 sm:$0x3]
    %v43 = vlaneseq
    %v44 = vshrl.u32 %v43, 7
    %v45 = vsub.s32 0, %v44
    %v46 = vrot.slane %v41, %v45
    %v47 = vlaneseq
    %v48 = vshrl.u32 %v47, 7
    %v49 = vsub.s32 1, %v48
    %v50 = vrot.slane %v41, %v49
    %vm53 = vcmask 130048
    %v55 = vsel %vm53, %v35, 0
    %57 = vmatprep.subr.mxu0 %v37
    %58 = vmatpush1.msra.mxu0 %v36
    %59 = vmatprep.subr.mxu0 %v39
    %60 = vmatpush1.msra.mxu0 %v38
    %61 = vmatprep.subr.mxu0 0.0
    %62 = vmatpush1.msra.mxu0 0.0
    %63 = vmatprep.subr.mxu0 0.0
    %64 = vmatpush1.msra.mxu0 0.0
    %65 = vmatprep.subr.mxu0 0.0
    %66 = vmatpush1.msra.mxu0 0.0
    %67 = vmatprep.subr.mxu0 0.0
    %68 = vmatpush1.msra.mxu0 0.0
    %69 = vmatprep.subr.mxu0 0.0
    %70 = vmatpush1.msra.mxu0 0.0
    %71 = vmatprep.subr.mxu0 0.0
    %72 = vmatpush1.msra.mxu0 0.0
    %73 = vmatprep.subr.mxu0 0.0
    %74 = vmatpush1.msra.mxu0 0.0
    %75 = vmatprep.subr.mxu0 0.0
    %76 = vmatpush1.msra.mxu0 0.0
    %77 = vmatprep.subr.mxu0 0.0
    %78 = vmatpush1.msra.mxu0 0.0
    %79 = vmatprep.subr.mxu0 0.0
    %80 = vmatpush1.msra.mxu0 0.0
    %81 = vmatprep.subr.mxu0 0.0
    %82 = vmatpush1.msra.mxu0 0.0
    %83 = vmatprep.subr.mxu0 0.0
    %84 = vmatpush1.msra.mxu0 0.0
    %85 = vmatprep.subr.mxu0 0.0
    %86 = vmatpush1.msra.mxu0 0.0
    %87 = vmatprep.subr.mxu0 0.0
    %88 = vmatpush1.msra.mxu0 0.0
    %89 = vmatprep.subr.mxu0 0.0
    %90 = vmatpush1.msra.mxu0 0.0
    %91 = vmatprep.subr.mxu0 0.0
    %92 = vmatpush1.msra.mxu0 0.0
    %93 = vmatprep.subr.mxu0 0.0
    %94 = vmatpush1.msra.mxu0 0.0
    %95 = vmatprep.subr.mxu0 0.0
    %96 = vmatpush1.msra.mxu0 0.0
    %97 = vmatprep.subr.mxu0 0.0
    %98 = vmatpush1.msra.mxu0 0.0
    %99 = vmatprep.subr.mxu0 0.0
    %100 = vmatpush1.msra.mxu0 0.0
    %101 = vmatprep.subr.mxu0 0.0
    %102 = vmatpush1.msra.mxu0 0.0
    %103 = vmatprep.subr.mxu0 0.0
    %104 = vmatpush1.msra.mxu0 0.0
    %105 = vmatprep.subr.mxu0 0.0
    %106 = vmatpush1.msra.mxu0 0.0
    %107 = vmatprep.subr.mxu0 0.0
    %108 = vmatpush1.msra.mxu0 0.0
    %109 = vmatprep.subr.mxu0 0.0
    %110 = vmatpush1.msra.mxu0 0.0
    %111 = vmatprep.subr.mxu0 0.0
    %112 = vmatpush1.msra.mxu0 0.0
    %113 = vmatprep.subr.mxu0 0.0
    %114 = vmatpush1.msra.mxu0 0.0
    %115 = vmatprep.subr.mxu0 0.0
    %116 = vmatpush1.msra.mxu0 0.0
    %117 = vmatprep.subr.mxu0 0.0
    %118 = vmatpush1.msra.mxu0 0.0
    %119 = vmatprep.subr.mxu0 0.0
    %120 = vmatpush1.msra.mxu0 0.0
    %121 = vmatprep.mubr.f32.mxu0 0.0
    %122 = vmatmul.mubr.f32.gmra.mrb[0].mxu0 %v55
    %v123 = vpop.f32.mrb[0].mxu0
    %v124 = vadd.f32 %v46, %v123
    %v125 = vpop.f32.mrb[0].mxu0
    %v126 = vadd.f32 %v50, %v125
    %127 = vdwg.mxu0
    %v128 = vtanh.pop %v124
    %v129 = vtanh.pop %v126
    %v130 = vld [vmem:[#allocation2 + $0x30] sm:$0xff]
    %v131 = vld [vmem:[#allocation2 + $0x40] sm:$0xff]
    %v132 = vld [vmem:[#allocation2 + $0x50] sm:$0xff]
    %v133 = vld [vmem:[#allocation2 + $0x60] sm:$0xff]
    %v134 = vld [vmem:[#allocation2 + $0x70] sm:$0xff]
    %v135 = vld [vmem:[#allocation2 + $0x80] sm:$0xff]
    %v136 = vld [vmem:[#allocation2 + $0x90] sm:$0xff]
    %v137 = vld [vmem:[#allocation2 + $0xa0] sm:$0xff]
    %v138 = vld [vmem:[#allocation2 + $0xb0] sm:$0xff]
    %v139 = vld [vmem:[#allocation2 + $0xc0] sm:$0xff]
    %v140 = vld [vmem:[#allocation2 + $0xd0] sm:$0xff]
    %v141 = vld [vmem:[#allocation2 + $0xe0] sm:$0xff]
    %v142 = vld [vmem:[#allocation2 + $0xf0] sm:$0xff]
    %v143 = vld [vmem:[#allocation2 + $0x100] sm:$0xff]
    %v144 = vld [vmem:[#allocation2 + $0x110] sm:$0xff]
    %v145 = vld [vmem:[#allocation2 + $0x120] sm:$0xff]
    %v146 = vld [vmem:[#allocation2 + $0x130] sm:$0xff]
    %v147 = vld [vmem:[#allocation2 + $0x140] sm:$0xff]
    %v148 = vld [vmem:[#allocation2 + $0x150] sm:$0xff]
    %v149 = vld [vmem:[#allocation2 + $0x160] sm:$0xff]
    %v150 = vld [vmem:[#allocation2 + $0x170] sm:$0xff]
    %v151 = vld [vmem:[#allocation2 + $0x180] sm:$0xff]
    %v152 = vld [vmem:[#allocation2 + $0x190] sm:$0xff]
    %v153 = vld [vmem:[#allocation2 + $0x1a0] sm:$0xff]
    %v154 = vld [vmem:[#allocation2 + $0x1b0] sm:$0xff]
    %v155 = vld [vmem:[#allocation2 + $0x1c0] sm:$0xff]
    %v156 = vld [vmem:[#allocation2 + $0x1d0] sm:$0xff]
    %v157 = vld [vmem:[#allocation2 + $0x1e0] sm:$0xff]
    %v158 = vld [vmem:[#allocation2 + $0x1f0] sm:$0xff]
    %v159 = vld [vmem:[#allocation2 + $0x200] sm:$0xff]
    %v160 = vld [vmem:[#allocation2 + $0x210] sm:$0xff]
    %v161 = vld [vmem:[#allocation2 + $0x220] sm:$0xff]
    %v162 = vld [vmem:[#allocation2 + $0x230] ss:$0 sm:$0xff]
    %163 = vmatprep.subr.mxu0 0.0
    %164 = vmatpush1.msra.mxu0 %v130
    %165 = vmatprep.subr.mxu0 0.0
    %166 = vmatpush1.msra.mxu0 %v131
    %167 = vmatprep.subr.mxu0 0.0
    %168 = vmatpush1.msra.mxu0 %v132
    %169 = vmatprep.subr.mxu0 0.0
    %170 = vmatpush1.msra.mxu0 %v133
    %171 = vmatprep.subr.mxu0 0.0
    %172 = vmatpush1.msra.mxu0 %v134
    %173 = vmatprep.subr.mxu0 0.0
    %174 = vmatpush1.msra.mxu0 %v135
    %175 = vmatprep.subr.mxu0 0.0
    %176 = vmatpush1.msra.mxu0 %v136
    %177 = vmatprep.subr.mxu0 0.0
    %178 = vmatpush1.msra.mxu0 %v137
    %179 = vmatprep.subr.mxu0 0.0
    %180 = vmatpush1.msra.mxu0 %v138
    %181 = vmatprep.subr.mxu0 0.0
    %182 = vmatpush1.msra.mxu0 %v139
    %183 = vmatprep.subr.mxu0 0.0
    %184 = vmatpush1.msra.mxu0 %v140
    %185 = vmatprep.subr.mxu0 0.0
    %186 = vmatpush1.msra.mxu0 %v141
    %187 = vmatprep.subr.mxu0 0.0
    %188 = vmatpush1.msra.mxu0 %v142
    %189 = vmatprep.subr.mxu0 0.0
    %190 = vmatpush1.msra.mxu0 %v143
    %191 = vmatprep.subr.mxu0 0.0
    %192 = vmatpush1.msra.mxu0 %v144
    %193 = vmatprep.subr.mxu0 0.0
    %194 = vmatpush1.msra.mxu0 %v145
    %195 = vmatprep.subr.mxu0 0.0
    %196 = vmatpush1.msra.mxu0 %v146
    %197 = vmatprep.subr.mxu0 0.0
    %198 = vmatpush1.msra.mxu0 %v147
    %199 = vmatprep.subr.mxu0 0.0
    %200 = vmatpush1.msra.mxu0 %v148
    %201 = vmatprep.subr.mxu0 0.0
    %202 = vmatpush1.msra.mxu0 %v149
    %203 = vmatprep.subr.mxu0 0.0
    %204 = vmatpush1.msra.mxu0 %v150
    %205 = vmatprep.subr.mxu0 0.0
    %206 = vmatpush1.msra.mxu0 %v151
    %207 = vmatprep.subr.mxu0 0.0
    %208 = vmatpush1.msra.mxu0 %v152
    %209 = vmatprep.subr.mxu0 0.0
    %210 = vmatpush1.msra.mxu0 %v153
    %211 = vmatprep.subr.mxu0 0.0
    %212 = vmatpush1.msra.mxu0 %v154
    %213 = vmatprep.subr.mxu0 0.0
    %214 = vmatpush1.msra.mxu0 %v155
    %215 = vmatprep.subr.mxu0 0.0
    %216 = vmatpush1.msra.mxu0 %v156
    %217 = vmatprep.subr.mxu0 0.0
    %218 = vmatpush1.msra.mxu0 %v157
    %219 = vmatprep.subr.mxu0 0.0
    %220 = vmatpush1.msra.mxu0 %v158
    %221 = vmatprep.subr.mxu0 0.0
    %222 = vmatpush1.msra.mxu0 %v159
    %223 = vmatprep.subr.mxu0 0.0
    %224 = vmatpush1.msra.mxu0 %v160
    %225 = vmatprep.subr.mxu0 0.0
    %226 = vmatpush1.msra.mxu0 %v161
    %227 = vmatprep.mubr.f32.mxu0 %v129
    %228 = vmatmul.mubr.f32.gmra.mrb[0].mxu0 %v128
    %v229 = vpop.f32.mrb[0].mxu0
    %v230 = vadd.f32 %v162, %v229
    %v231 = vpop.f32.mrb[0].mxu0
    %232 = vdwg.mxu0
    %v233 = vtanh.pop %v230
    %v234 = vld [vmem:[%s3] sm:$0xff]
    %v235 = vld [vmem:[%s3 + $0x8] sm:$0xff]
    %v236 = vld [vmem:[%s3 + $0x10] sm:$0xff]
    %v237 = vld [vmem:[%s3 + $0x18] sm:$0xff]
    %v238 = vld [vmem:[%s3 + $0x20] sm:$0xff]
    %v239 = vld [vmem:[%s3 + $0x28] sm:$0xff]
    %v240 = vld [vmem:[%s3 + $0x30] sm:$0xff]
    %v241 = vld [vmem:[%s3 + $0x38] sm:$0xff]
    %v242 = vld [vmem:[%s3 + $0x40] sm:$0xff]
    %v243 = vld [vmem:[%s3 + $0x48] sm:$0xff]
    %v244 = vld [vmem:[%s3 + $0x50] sm:$0xff]
    %v245 = vld [vmem:[%s3 + $0x58] sm:$0xff]
    %v246 = vld [vmem:[%s3 + $0x60] sm:$0xff]
    %v247 = vld [vmem:[%s3 + $0x68] sm:$0xff]
    %v248 = vld [vmem:[%s3 + $0x70] sm:$0xff]
    %v249 = vld [vmem:[%s3 + $0x78] sm:$0xff]
    %v250 = vld [vmem:[%s3 + $0x80] sm:$0x1]
    %v251 = vlaneseq
    %v252 = vshrl.u32 %v251, 7
    %v253 = vsub.s32 0, %v252
    %v254 = vrot.slane %v250, %v253
    %255 = vmatprep.subr.mxu0 0.0
    %256 = vmatpush1.msra.mxu0 %v234
    %257 = vmatprep.subr.mxu0 0.0
    %258 = vmatpush1.msra.mxu0 %v235
    %259 = vmatprep.subr.mxu0 0.0
    %260 = vmatpush1.msra.mxu0 %v236
    %261 = vmatprep.subr.mxu0 0.0
    %262 = vmatpush1.msra.mxu0 %v237
    %263 = vmatprep.subr.mxu0 0.0
    %264 = vmatpush1.msra.mxu0 %v238
    %265 = vmatprep.subr.mxu0 0.0
    %266 = vmatpush1.msra.mxu0 %v239
    %267 = vmatprep.subr.mxu0 0.0
    %268 = vmatpush1.msra.mxu0 %v240
    %269 = vmatprep.subr.mxu0 0.0
    %270 = vmatpush1.msra.mxu0 %v241
    %271 = vmatprep.subr.mxu0 0.0
    %272 = vmatpush1.msra.mxu0 %v242
    %273 = vmatprep.subr.mxu0 0.0
    %274 = vmatpush1.msra.mxu0 %v243
    %275 = vmatprep.subr.mxu0 0.0
    %276 = vmatpush1.msra.mxu0 %v244
    %277 = vmatprep.subr.mxu0 0.0
    %278 = vmatpush1.msra.mxu0 %v245
    %279 = vmatprep.subr.mxu0 0.0
    %280 = vmatpush1.msra.mxu0 %v246
    %281 = vmatprep.subr.mxu0 0.0
    %282 = vmatpush1.msra.mxu0 %v247
    %283 = vmatprep.subr.mxu0 0.0
    %284 = vmatpush1.msra.mxu0 %v248
    %285 = vmatprep.subr.mxu0 0.0
    %286 = vmatpush1.msra.mxu0 %v249
    %287 = vmatprep.subr.mxu0 0.0
    %288 = vmatpush1.msra.mxu0 0.0
    %289 = vmatprep.subr.mxu0 0.0
    %290 = vmatpush1.msra.mxu0 0.0
    %291 = vmatprep.subr.mxu0 0.0
    %292 = vmatpush1.msra.mxu0 0.0
    %293 = vmatprep.subr.mxu0 0.0
    %294 = vmatpush1.msra.mxu0 0.0
    %295 = vmatprep.subr.mxu0 0.0
    %296 = vmatpush1.msra.mxu0 0.0
    %297 = vmatprep.subr.mxu0 0.0
    %298 = vmatpush1.msra.mxu0 0.0
    %299 = vmatprep.subr.mxu0 0.0
    %300 = vmatpush1.msra.mxu0 0.0
    %301 = vmatprep.subr.mxu0 0.0
    %302 = vmatpush1.msra.mxu0 0.0
    %303 = vmatprep.subr.mxu0 0.0
    %304 = vmatpush1.msra.mxu0 0.0
    %305 = vmatprep.subr.mxu0 0.0
    %306 = vmatpush1.msra.mxu0 0.0
    %307 = vmatprep.subr.mxu0 0.0
    %308 = vmatpush1.msra.mxu0 0.0
    %309 = vmatprep.subr.mxu0 0.0
    %310 = vmatpush1.msra.mxu0 0.0
    %311 = vmatprep.subr.mxu0 0.0
    %312 = vmatpush1.msra.mxu0 0.0
    %313 = vmatprep.subr.mxu0 0.0
    %314 = vmatpush1.msra.mxu0 0.0
    %315 = vmatprep.subr.mxu0 0.0
    %316 = vmatpush1.msra.mxu0 0.0
    %317 = vmatprep.subr.mxu0 0.0
    %318 = vmatpush1.msra.mxu0 0.0
    %319 = vmatprep.mubr.f32.mxu0 0.0
    %320 = vmatmul.mubr.f32.gmra.mrb[0].mxu0 %v233
    %v321 = vpop.f32.mrb[0].mxu0
    %v322 = vadd.f32 %v254, %v321
    %v323 = vpop.f32.mrb[0].mxu0
    %324 = vdwg.mxu0
    %v325 = vtanh.pop %v322
    %v326 = vld [vmem:[%s4] sm:$0x1]
    %v327 = vld [vmem:[%s4 + $0x1] sm:$0x1]
    %v328 = vld [vmem:[%s4 + $0x2] sm:$0x1]
    %v329 = vld [vmem:[%s4 + $0x3] sm:$0x1]
    %v330 = vld [vmem:[%s1] sm:$0xff]
    %v331 = vsub.f32 %v330, %v325
    %v332 = vmul.f32 %v331, %v331
    %v333 = vlaneseq
    %v334 = vshrl.u32 %v333, 7
    %v335 = vsub.s32 0, %v334
    %v336 = vrot.slane %v326, %v335
    %v337 = vmul.f32 %v332, %v336
    %vm338 = vcmask 64512
    %v339 = vsel %vm338, %v337, 0.0
    %340 = vadd.xlane.f32.xlu0 %v339
    %v341 = vpop.xlane.xlu0 %340
    %v342 = vlaneseq
    %v343 = vshrl.u32 %v342, 7
    %v344 = vsub.s32 0, %v343
    %v345 = vrot.slane %v327, %v344
    %v346 = vadd.f32 %v341, %v345
    %vm347 = vcmp.gt.f32.partialorder %v328, 0.0
    %v348 = vsel %vm347, 1, 0
    %v349 = vlaneseq
    %v350 = vshrl.u32 %v349, 7
    %v351 = vsub.s32 0, %v350
    %v352 = vrot.slane %v348, %v351
    %vm353 = vcmp.eq.s32.totalorder %v352, 1
    %v354 = vsel %vm353, %v325, %v322
    %vm355 = vcmp.gt.f32.partialorder %v329, 0.0
    %v356 = vsel %vm355, 1, 0
    %v357 = vlaneseq
    %v358 = vshrl.u32 %v357, 7
    %v359 = vsub.s32 0, %v358
    %v360 = vrot.slane %v356, %v359
    %vm361 = vcmp.eq.s32.totalorder %v360, 1
    %v362 = vsel %vm361, %v346, %v354
    %363 = vst.msk [vmem:[#allocation5] sm:$0xff] %vm338, %v362
    // Predicated region
    $region26: #{tpu_custom_call.1} parent=1 // pred_check
      _
    $region27: #{tpu_custom_call.1} parent=1 // pred_check_branch
      %365 = sbr.rel (0) target = $region29
    $region28: #{tpu_custom_call.1} parent=1 // pred_region
      %s367 = ssub.s32 128, 128
      %368 = vsyncadd [#allocation4], %s367
      %s370 = sshll.u32 [#allocation5], 4
      %s371 = int_to_ptr.vmem [resolvable:$true] %s370
      %373 = dma.vmem_to_hbm [thread:$0]  %s371, 128, %s5, [#allocation4]
    $region29: #{tpu_custom_call.1} parent=1 // pred_fallthru
      _
    // Predicated region
    $region30: #{tpu_custom_call.1} parent=1 // pred_check
      _
    $region31: #{tpu_custom_call.1} parent=1 // pred_check_branch
      %375 = sbr.rel (0) target = $region33
    $region32: #{tpu_custom_call.1} parent=1 // pred_region
      %376 = dma.done [#allocation4], 128
    $region33: #{tpu_custom_call.1} parent=1 // pred_fallthru
      _
    %377 = vsyncpa [#allocation3], 1
    %378 = vsyncpa [#allocation4], 1

</llo_original>
